<compile_context>
chip_gen: v7x
topology: tpu7x:2x2x1
jax: 0.10.0
libtpu: 0.0.40
codegen_flags: <defaults>
</compile_context>

<pallas_src>
import functools

import jax
import jax.numpy as jnp
from jax.experimental import pallas as pl
from jax.experimental.pallas import tpu as pltpu

HIDDEN = 256
V_PAD = 128            # final layer padded from 1 -> 128 lanes (lane-dense out)
MAX_TM = 512           # batch tile rows; fits comfortably in v7x's 64 MiB VMEM


def _round_up(x, m):
    return ((x + m - 1) // m) * m


def _value_net_kernel(x_ref, w1_ref, b1_ref, w2_ref, b2_ref, wv_ref, bv_ref,
                      o_ref):
    # fc1 + relu   (bf16 inputs, f32 MXU accumulation)
    h1 = jnp.dot(x_ref[...], w1_ref[...], preferred_element_type=jnp.float32)
    h1 = jnp.maximum(h1 + b1_ref[...], 0.0)
    # fc2 + relu
    h2 = jnp.dot(h1.astype(jnp.bfloat16), w2_ref[...],
                 preferred_element_type=jnp.float32)
    h2 = jnp.maximum(h2 + b2_ref[...], 0.0)
    # v + relu   (padded to 128 output lanes; extra lanes carry zeros)
    v = jnp.dot(h2.astype(jnp.bfloat16), wv_ref[...],
                preferred_element_type=jnp.float32)
    v = jnp.maximum(v + bv_ref[...], 0.0)
    o_ref[...] = v.astype(o_ref.dtype)


def prepare_params(params, n_inputs):
    """One-time (out of the hot path) padding + bf16 casting of the weights."""
    k_pad = _round_up(max(n_inputs, 1), 128)
    w1 = jnp.zeros((k_pad, HIDDEN), jnp.bfloat16)
    w1 = w1.at[:n_inputs, :].set(params["w1"].astype(jnp.bfloat16))
    w2 = params["w2"].astype(jnp.bfloat16)
    wv = jnp.zeros((HIDDEN, V_PAD), jnp.bfloat16)
    wv = wv.at[:, :1].set(params["wv"].astype(jnp.bfloat16))
    b1 = params["b1"].astype(jnp.float32)
    b2 = params["b2"].astype(jnp.float32)
    bv = jnp.zeros((1, V_PAD), jnp.float32).at[:, :1].set(params["bv"])
    return dict(w1=w1, b1=b1, w2=w2, b2=b2, wv=wv, bv=bv, k_pad=k_pad)


@jax.jit
def value_network_forward(x, prepped):
    """x: [B, n_inputs] float32. Returns [B, 1] float32 (relu'd value)."""
    w1, b1, w2, b2, wv, bv = (prepped["w1"], prepped["b1"], prepped["w2"],
                              prepped["b2"], prepped["wv"], prepped["bv"])
    B, n_inputs = x.shape
    K_pad = w1.shape[0]

    # Batch tile: small batches use one minimal tile; large batches stream
    # MAX_TM-row tiles (double-buffered) across the grid.
    TM = min(MAX_TM, _round_up(B, 8))
    B_pad = _round_up(B, TM)
    n_tiles = B_pad // TM

    # Pad batch rows and the K (feature) dim; cast activations to bf16 so the
    # x-tile DMA and the MXU both run at bf16 width.
    x_p = jnp.zeros((B_pad, K_pad), jnp.bfloat16)
    x_p = x_p.at[:B, :n_inputs].set(x.astype(jnp.bfloat16))

    tiled = lambda shape: pl.BlockSpec(shape, lambda i: (0, 0))

    out = pl.pallas_call(
        _value_net_kernel,
        out_shape=jax.ShapeDtypeStruct((B_pad, V_PAD), jnp.float32),
        grid=(n_tiles,),
        in_specs=[
            pl.BlockSpec((TM, K_pad), lambda i: (i, 0)),   # x (batch-tiled)
            tiled((K_pad, HIDDEN)),                        # w1 (resident)
            tiled((1, HIDDEN)),                            # b1
            tiled((HIDDEN, HIDDEN)),                       # w2
            tiled((1, HIDDEN)),                            # b2
            tiled((HIDDEN, V_PAD)),                        # wv (padded)
            tiled((1, V_PAD)),                             # bv (padded)
        ],
        out_specs=pl.BlockSpec((TM, V_PAD), lambda i: (i, 0)),
        compiler_params=pltpu.CompilerParams(
            dimension_semantics=("parallel",),
            vmem_limit_bytes=32 * 1024 * 1024,
        ),
    )(x_p, w1, b1, w2, b2, wv, bv)

    # TODO(synk): if profiling shows HBM-write-bound at very large B, pack the
    # single value column into lane-dense rows instead of a [TM, 128] slab.
    return out[:B, :1]


def init_params(key, n_inputs):
    """Deterministic init mimicking torch.nn.Linear default U[-1/sqrt(fan_in), ...]."""
    ks = jax.random.split(key, 6)

    def linear(kw, kb, fan_in, fan_out):
        bound = 1.0 / jnp.sqrt(jnp.float32(fan_in))
        w = jax.random.uniform(kw, (fan_in, fan_out), jnp.float32, -bound, bound)
        b = jax.random.uniform(kb, (1, fan_out), jnp.float32, -bound, bound)
        return w, b

    w1, b1 = linear(ks[0], ks[1], n_inputs, HIDDEN)
    w2, b2 = linear(ks[2], ks[3], HIDDEN, HIDDEN)
    wv, bv = linear(ks[4], ks[5], HIDDEN, 1)
    return dict(w1=w1, b1=b1, w2=w2, b2=b2, wv=wv, bv=bv)


def _reference_matching(x, params):
    """Same precision recipe as the kernel: bf16 matmul inputs, f32 accum."""
    def layer(a, w, b):
        y = jnp.dot(a.astype(jnp.bfloat16), w.astype(jnp.bfloat16),
                    preferred_element_type=jnp.float32)
        return jnp.maximum(y + b, 0.0)
    h1 = layer(x, params["w1"], params["b1"])
    h2 = layer(h1, params["w2"], params["b2"])
    return layer(h2, params["wv"], params["bv"])


def _reference_f32(x, params):
    h1 = jnp.maximum(x @ params["w1"] + params["b1"], 0.0)
    h2 = jnp.maximum(h1 @ params["w2"] + params["b2"], 0.0)
    return jnp.maximum(h2 @ params["wv"] + params["bv"], 0.0)


if __name__ == "__main__":
    key = jax.random.PRNGKey(0)
    k_x, k_p = jax.random.split(key)

    batch, n_inputs = 2, 32
    x = jax.random.normal(k_x, (batch, n_inputs), jnp.float32)
    params = init_params(k_p, n_inputs)
    prepped = prepare_params(params, n_inputs)

    out = value_network_forward(x, prepped)
    jax.block_until_ready(out)

    ref_match = _reference_matching(x, params)
    ref_f32 = _reference_f32(x, params)
    assert out.shape == (batch, 1), out.shape
    assert jnp.allclose(out, ref_match, atol=1e-3, rtol=1e-3), (out, ref_match)
    assert jnp.allclose(out, ref_f32, atol=5e-2, rtol=5e-2), (out, ref_f32)

    print("KERNEL_OK")
</pallas_src>

<mosaic_0001>
module attributes {stable_mosaic.version = 11 : i64} {
  func.func @_value_net_kernel(%arg0: i32, %arg1: memref<8x128xbf16, #tpu.memory_space<vmem>>, %arg2: memref<128x256xbf16, #tpu.memory_space<vmem>>, %arg3: memref<1x256xf32, #tpu.memory_space<vmem>>, %arg4: memref<256x256xbf16, #tpu.memory_space<vmem>>, %arg5: memref<1x256xf32, #tpu.memory_space<vmem>>, %arg6: memref<256x128xbf16, #tpu.memory_space<vmem>>, %arg7: memref<1x128xf32, #tpu.memory_space<vmem>>, %arg8: memref<8x128xf32, #tpu.memory_space<vmem>>) attributes {dimension_semantics = [#tpu.dimension_semantics<parallel>], iteration_bounds = array<i64: 1>, scalar_prefetch = 0 : i64, scratch_operands = 0 : i64, tpu.core_type = #tpu.core_type<tc>, window_params = [{transform_indices = @transform_0, window_bounds = array<i64: 8, 128>}, {pipeline_mode = #tpu.pipeline_mode<synchronous>, transform_indices = @transform_1, window_bounds = array<i64: 128, 256>}, {pipeline_mode = #tpu.pipeline_mode<synchronous>, transform_indices = @transform_2, window_bounds = array<i64: 1, 256>}, {pipeline_mode = #tpu.pipeline_mode<synchronous>, transform_indices = @transform_3, window_bounds = array<i64: 256, 256>}, {pipeline_mode = #tpu.pipeline_mode<synchronous>, transform_indices = @transform_4, window_bounds = array<i64: 1, 256>}, {pipeline_mode = #tpu.pipeline_mode<synchronous>, transform_indices = @transform_5, window_bounds = array<i64: 256, 128>}, {pipeline_mode = #tpu.pipeline_mode<synchronous>, transform_indices = @transform_6, window_bounds = array<i64: 1, 128>}, {transform_indices = @transform_7, window_bounds = array<i64: 8, 128>}]} {
    %c0 = arith.constant 0 : index
    %c0_0 = arith.constant 0 : index
    %0 = vector.load %arg1[%c0, %c0_0] : memref<8x128xbf16, #tpu.memory_space<vmem>>, vector<8x128xbf16>
    %c0_1 = arith.constant 0 : index
    %c0_2 = arith.constant 0 : index
    %1 = vector.load %arg2[%c0_1, %c0_2] : memref<128x256xbf16, #tpu.memory_space<vmem>>, vector<128x256xbf16>
    %cst = arith.constant dense<0.000000e+00> : vector<8x256xf32>
    %2 = tpu.matmul %0, %1, %cst {dimension_numbers = #tpu.dot_dimension_numbers<[1], [0], [0], [1], [0, 0, 1, 1], [], []>} : vector<8x128xbf16>, vector<128x256xbf16>, vector<8x256xf32> -> vector<8x256xf32>
    %c0_3 = arith.constant 0 : index
    %c0_4 = arith.constant 0 : index
    %3 = vector.load %arg3[%c0_3, %c0_4] : memref<1x256xf32, #tpu.memory_space<vmem>>, vector<1x256xf32>
    %4 = vector.broadcast %3 : vector<1x256xf32> to vector<8x256xf32>
    %5 = arith.addf %2, %4 : vector<8x256xf32>
    %cst_5 = arith.constant 0.000000e+00 : f32
    %6 = vector.broadcast %cst_5 : f32 to vector<8x256xf32>
    %7 = arith.maximumf %5, %6 : vector<8x256xf32>
    %8 = arith.truncf %7 : vector<8x256xf32> to vector<8x256xbf16>
    %c0_6 = arith.constant 0 : index
    %c0_7 = arith.constant 0 : index
    %9 = vector.load %arg4[%c0_6, %c0_7] : memref<256x256xbf16, #tpu.memory_space<vmem>>, vector<256x256xbf16>
    %cst_8 = arith.constant dense<0.000000e+00> : vector<8x256xf32>
    %10 = tpu.matmul %8, %9, %cst_8 {dimension_numbers = #tpu.dot_dimension_numbers<[1], [0], [0], [1], [0, 0, 1, 1], [], []>} : vector<8x256xbf16>, vector<256x256xbf16>, vector<8x256xf32> -> vector<8x256xf32>
    %c0_9 = arith.constant 0 : index
    %c0_10 = arith.constant 0 : index
    %11 = vector.load %arg5[%c0_9, %c0_10] : memref<1x256xf32, #tpu.memory_space<vmem>>, vector<1x256xf32>
    %12 = vector.broadcast %11 : vector<1x256xf32> to vector<8x256xf32>
    %13 = arith.addf %10, %12 : vector<8x256xf32>
    %cst_11 = arith.constant 0.000000e+00 : f32
    %14 = vector.broadcast %cst_11 : f32 to vector<8x256xf32>
    %15 = arith.maximumf %13, %14 : vector<8x256xf32>
    %16 = arith.truncf %15 : vector<8x256xf32> to vector<8x256xbf16>
    %c0_12 = arith.constant 0 : index
    %c0_13 = arith.constant 0 : index
    %17 = vector.load %arg6[%c0_12, %c0_13] : memref<256x128xbf16, #tpu.memory_space<vmem>>, vector<256x128xbf16>
    %cst_14 = arith.constant dense<0.000000e+00> : vector<8x128xf32>
    %18 = tpu.matmul %16, %17, %cst_14 {dimension_numbers = #tpu.dot_dimension_numbers<[1], [0], [0], [1], [0, 0, 1, 1], [], []>} : vector<8x256xbf16>, vector<256x128xbf16>, vector<8x128xf32> -> vector<8x128xf32>
    %c0_15 = arith.constant 0 : index
    %c0_16 = arith.constant 0 : index
    %19 = vector.load %arg7[%c0_15, %c0_16] : memref<1x128xf32, #tpu.memory_space<vmem>>, vector<1x128xf32>
    %20 = vector.broadcast %19 : vector<1x128xf32> to vector<8x128xf32>
    %21 = arith.addf %18, %20 : vector<8x128xf32>
    %cst_17 = arith.constant 0.000000e+00 : f32
    %22 = vector.broadcast %cst_17 : f32 to vector<8x128xf32>
    %23 = arith.maximumf %21, %22 : vector<8x128xf32>
    %c0_18 = arith.constant 0 : index
    %c0_19 = arith.constant 0 : index
    %24 = vector.load %arg8[%c0_18, %c0_19] : memref<8x128xf32, #tpu.memory_space<vmem>>, vector<8x128xf32>
    tpu.vector_store %arg8[%c0_18, %c0_19], %23 {strides = array<i32>} : memref<8x128xf32, #tpu.memory_space<vmem>>, vector<8x128xf32>,
    return
  }
  func.func @transform_0(%arg0: i32) -> (i32, i32) {
    %c0_i32 = arith.constant 0 : i32
    %c0_i32_0 = arith.constant 0 : i32
    return %arg0, %c0_i32 : i32, i32
  }
  func.func @transform_1(%arg0: i32) -> (i32, i32) {
    %c0_i32 = arith.constant 0 : i32
    %c0_i32_0 = arith.constant 0 : i32
    %c0_i32_1 = arith.constant 0 : i32
    return %c0_i32, %c0_i32_0 : i32, i32
  }
  func.func @transform_2(%arg0: i32) -> (i32, i32) {
    %c0_i32 = arith.constant 0 : i32
    %c0_i32_0 = arith.constant 0 : i32
    %c0_i32_1 = arith.constant 0 : i32
    return %c0_i32, %c0_i32_0 : i32, i32
  }
  func.func @transform_3(%arg0: i32) -> (i32, i32) {
    %c0_i32 = arith.constant 0 : i32
    %c0_i32_0 = arith.constant 0 : i32
    %c0_i32_1 = arith.constant 0 : i32
    return %c0_i32, %c0_i32_0 : i32, i32
  }
  func.func @transform_4(%arg0: i32) -> (i32, i32) {
    %c0_i32 = arith.constant 0 : i32
    %c0_i32_0 = arith.constant 0 : i32
    %c0_i32_1 = arith.constant 0 : i32
    return %c0_i32, %c0_i32_0 : i32, i32
  }
  func.func @transform_5(%arg0: i32) -> (i32, i32) {
    %c0_i32 = arith.constant 0 : i32
    %c0_i32_0 = arith.constant 0 : i32
    %c0_i32_1 = arith.constant 0 : i32
    return %c0_i32, %c0_i32_0 : i32, i32
  }
  func.func @transform_6(%arg0: i32) -> (i32, i32) {
    %c0_i32 = arith.constant 0 : i32
    %c0_i32_0 = arith.constant 0 : i32
    %c0_i32_1 = arith.constant 0 : i32
    return %c0_i32, %c0_i32_0 : i32, i32
  }
  func.func @transform_7(%arg0: i32) -> (i32, i32) {
    %c0_i32 = arith.constant 0 : i32
    %c0_i32_0 = arith.constant 0 : i32
    return %arg0, %c0_i32 : i32, i32
  }
}

</mosaic_0001>

<llo_original>
// kernel: value_network_forward.1
$region0: #{value_network_forward.1}
  #allocation0 [shape = 'u32[]', space=smem, size = 0x4, offset = 0x4, fixed_abs, tag = 'smem constant byte address 0x4 - core index']
  #allocation1 [shape = 'u32[144,128]{1,0:T(1,128)}', space=vmem, size = 0x12000, scoped, tag = 'internal scratch']
  %s0 = inlined_call_operand.vmem [shape: bf16[8,128], index: 0, kind: input, shape index: {}]
  %s1 = inlined_call_operand.hbm [shape: bf16[128,256], index: 1, kind: input, shape index: {}]
  %s2 = inlined_call_operand.vmem [shape: f32[1,256], index: 2, kind: input, shape index: {}]
  %s3 = inlined_call_operand.hbm [shape: bf16[256,256], index: 3, kind: input, shape index: {}]
  %s4 = inlined_call_operand.vmem [shape: f32[1,256], index: 4, kind: input, shape index: {}]
  %s5 = inlined_call_operand.hbm [shape: bf16[256,128], index: 5, kind: input, shape index: {}]
  %s6 = inlined_call_operand.vmem [shape: f32[1,128], index: 6, kind: input, shape index: {}]
  %s7 = inlined_call_operand.vmem [shape: f32[8,128], index: 7, kind: output, shape index: {}]
  %s8 = sld [smem:[#allocation0]]
  $region50: #{value_network_forward.1} parent=0
    _
  %s10 = ssub.s32 1, %s8
  %s11 = scalar_select 0, %s10, %s8
  $region1: #{value_network_forward.1} parent=0
    #allocation2 [shape = 'u8[65536]{0}', space=vmem, size = 0x10000, scoped, tag = 'input window, operand 1, single buffered']
    #allocation3 [shape = 's32[1]{0}', space=sflag, size = 0x4, scoped, tag = 'scoped memory for value_network_forward.1']
    #allocation4 [shape = 'u8[131072]{0}', space=vmem, size = 0x20000, scoped, tag = 'input window, operand 3, single buffered']
    #allocation5 [shape = 's32[1]{0}', space=sflag, size = 0x4, scoped, tag = 'scoped memory for value_network_forward.1']
    #allocation6 [shape = 'u8[65536]{0}', space=vmem, size = 0x10000, scoped, tag = 'input window, operand 5, single buffered']
    %12 = vsyncpa [#allocation3], 0
    %13 = vsyncpa [#allocation5], 0
    // Predicated region
    $region2: #{value_network_forward.1} parent=1 // pred_check
      _
    $region3: #{value_network_forward.1} parent=1 // pred_check_branch
      %15 = sbr.rel (0) target = $region5
    $region4: #{value_network_forward.1} parent=1 // pred_region
      _
    $region5: #{value_network_forward.1} parent=1 // pred_fallthru
      _
    // Predicated region
    $region6: #{value_network_forward.1} parent=1 // pred_check
      _
    $region7: #{value_network_forward.1} parent=1 // pred_check_branch
      %17 = sbr.rel (0) target = $region9
    $region8: #{value_network_forward.1} parent=1 // pred_region
      %s19 = ssub.s32 2048, 2048
      %20 = vsyncadd [#allocation3], %s19
      %s21 = sshll.u32 [#allocation2], 4
      %s22 = int_to_ptr.vmem [resolvable:$true] %s21
      %27 = dma.hbm_to_vmem [thread:$0]  %s1, 2048, %s22, [#allocation3], 128, 128, 8
    $region9: #{value_network_forward.1} parent=1 // pred_fallthru
      _
    // Predicated region
    $region10: #{value_network_forward.1} parent=1 // pred_check
      _
    $region11: #{value_network_forward.1} parent=1 // pred_check_branch
      %29 = sbr.rel (0) target = $region13
    $region12: #{value_network_forward.1} parent=1 // pred_region
      _
    $region13: #{value_network_forward.1} parent=1 // pred_fallthru
      _
    // Predicated region
    $region14: #{value_network_forward.1} parent=1 // pred_check
      _
    $region15: #{value_network_forward.1} parent=1 // pred_check_branch
      %31 = sbr.rel (0) target = $region17
    $region16: #{value_network_forward.1} parent=1 // pred_region
      %s33 = ssub.s32 4096, 4096
      %34 = vsyncadd [#allocation5], %s33
      %s35 = sshll.u32 [#allocation4], 4
      %s36 = int_to_ptr.vmem [resolvable:$true] %s35
      %41 = dma.hbm_to_vmem [thread:$0]  %s3, 4096, %s36, [#allocation5], 128, 128, 8
    $region17: #{value_network_forward.1} parent=1 // pred_fallthru
      _
    // Predicated region
    $region18: #{value_network_forward.1} parent=1 // pred_check
      _
    $region19: #{value_network_forward.1} parent=1 // pred_check_branch
      %43 = sbr.rel (0) target = $region21
    $region20: #{value_network_forward.1} parent=1 // pred_region
      _
    $region21: #{value_network_forward.1} parent=1 // pred_fallthru
      _
    // Predicated region
    $region22: #{value_network_forward.1} parent=1 // pred_check
      _
    $region23: #{value_network_forward.1} parent=1 // pred_check_branch
      %45 = sbr.rel (0) target = $region25
    $region24: #{value_network_forward.1} parent=1 // pred_region
      %s47 = ssub.s32 2048, 2048
      %48 = vsyncadd [#allocation5], %s47
      %s49 = sshll.u32 [#allocation6], 4
      %s50 = int_to_ptr.vmem [resolvable:$true] %s49
      %55 = dma.hbm_to_vmem [thread:$0]  %s5, 2048, %s50, [#allocation5], 64, 64, 4
    $region25: #{value_network_forward.1} parent=1 // pred_fallthru
      _
    // Predicated region
    $region26: #{value_network_forward.1} parent=1 // pred_check
      _
    $region27: #{value_network_forward.1} parent=1 // pred_check_branch
      %57 = sbr.rel (0) target = $region29
    $region28: #{value_network_forward.1} parent=1 // pred_region
      _
    $region29: #{value_network_forward.1} parent=1 // pred_fallthru
      _
    // Predicated region
    $region30: #{value_network_forward.1} parent=1 // pred_check
      _
    $region31: #{value_network_forward.1} parent=1 // pred_check_branch
      %59 = sbr.rel (0) target = $region33
    $region32: #{value_network_forward.1} parent=1 // pred_region
      %60 = dma.done [#allocation3], 2048
    $region33: #{value_network_forward.1} parent=1 // pred_fallthru
      _
    // Predicated region
    $region34: #{value_network_forward.1} parent=1 // pred_check
      _
    $region35: #{value_network_forward.1} parent=1 // pred_check_branch
      %62 = sbr.rel (0) target = $region37
    $region36: #{value_network_forward.1} parent=1 // pred_region
      %63 = dma.done [#allocation5], 4096
    $region37: #{value_network_forward.1} parent=1 // pred_fallthru
      _
    // Predicated region
    $region38: #{value_network_forward.1} parent=1 // pred_check
      _
    $region39: #{value_network_forward.1} parent=1 // pred_check_branch
      %65 = sbr.rel (0) target = $region41
    $region40: #{value_network_forward.1} parent=1 // pred_region
      %66 = dma.done [#allocation5], 2048
    $region41: #{value_network_forward.1} parent=1 // pred_fallthru
      _
    %v68 = vld [vmem:[%s0] sm:$0xf]
    %v69 = vld [vmem:[#allocation2] sm:$0xff]
    %v70 = vld [vmem:[#allocation2 + $0x8] sm:$0xff]
    %v71 = vld [vmem:[#allocation2 + $0x10] sm:$0xff]
    %v72 = vld [vmem:[#allocation2 + $0x18] sm:$0xff]
    %v73 = vld [vmem:[#allocation2 + $0x20] sm:$0xff]
    %v74 = vld [vmem:[#allocation2 + $0x28] sm:$0xff]
    %v75 = vld [vmem:[#allocation2 + $0x30] sm:$0xff]
    %v76 = vld [vmem:[#allocation2 + $0x38] sm:$0xff]
    %v77 = vld [vmem:[#allocation2 + $0x40] sm:$0xff]
    %v78 = vld [vmem:[#allocation2 + $0x48] sm:$0xff]
    %v79 = vld [vmem:[#allocation2 + $0x50] sm:$0xff]
    %v80 = vld [vmem:[#allocation2 + $0x58] sm:$0xff]
    %v81 = vld [vmem:[#allocation2 + $0x60] sm:$0xff]
    %v82 = vld [vmem:[#allocation2 + $0x68] sm:$0xff]
    %v83 = vld [vmem:[#allocation2 + $0x70] sm:$0xff]
    %v84 = vld [vmem:[#allocation2 + $0x78] sm:$0xff]
    %v85 = vld [vmem:[%s2] sm:$0x3]
    %v87 = vlaneseq
    %v88 = vshrl.u32 %v87, 7
    %v89 = vsub.s32 0, %v88
    %v90 = vrot.slane %v85, %v89
    %v91 = vlaneseq
    %v92 = vshrl.u32 %v91, 7
    %v93 = vsub.s32 1, %v92
    %v94 = vrot.slane %v85, %v93
    %v113 = vunpack.c.l.b16 %v69
    %v114 = vunpack.c.h.b16 %v69
    %v115 = vunpack.c.l.b16 %v70
    %v116 = vunpack.c.h.b16 %v70
    %v117 = vunpack.c.l.b16 %v71
    %v118 = vunpack.c.h.b16 %v71
    %v119 = vunpack.c.l.b16 %v72
    %v120 = vunpack.c.h.b16 %v72
    %v121 = vunpack.c.l.b16 %v73
    %v122 = vunpack.c.h.b16 %v73
    %v123 = vunpack.c.l.b16 %v74
    %v124 = vunpack.c.h.b16 %v74
    %v125 = vunpack.c.l.b16 %v75
    %v126 = vunpack.c.h.b16 %v75
    %v127 = vunpack.c.l.b16 %v76
    %v128 = vunpack.c.h.b16 %v76
    %v129 = vunpack.c.l.b16 %v77
    %v130 = vunpack.c.h.b16 %v77
    %v131 = vunpack.c.l.b16 %v78
    %v132 = vunpack.c.h.b16 %v78
    %v133 = vunpack.c.l.b16 %v79
    %v134 = vunpack.c.h.b16 %v79
    %v135 = vunpack.c.l.b16 %v80
    %v136 = vunpack.c.h.b16 %v80
    %v137 = vunpack.c.l.b16 %v81
    %v138 = vunpack.c.h.b16 %v81
    %v139 = vunpack.c.l.b16 %v82
    %v140 = vunpack.c.h.b16 %v82
    %v141 = vunpack.c.l.b16 %v83
    %v142 = vunpack.c.h.b16 %v83
    %v143 = vunpack.c.l.b16 %v84
    %v144 = vunpack.c.h.b16 %v84
    %v145 = vpack.c.b16 %v115, %v113
    %v146 = vpack.c.b16 %v116, %v114
    %v147 = vpack.c.b16 %v119, %v117
    %v148 = vpack.c.b16 %v120, %v118
    %v149 = vpack.c.b16 %v123, %v121
    %v150 = vpack.c.b16 %v124, %v122
    %v151 = vpack.c.b16 %v127, %v125
    %v152 = vpack.c.b16 %v128, %v126
    %v153 = vpack.c.b16 %v131, %v129
    %v154 = vpack.c.b16 %v132, %v130
    %v155 = vpack.c.b16 %v135, %v133
    %v156 = vpack.c.b16 %v136, %v134
    %v157 = vpack.c.b16 %v139, %v137
    %v158 = vpack.c.b16 %v140, %v138
    %v159 = vpack.c.b16 %v143, %v141
    %v160 = vpack.c.b16 %v144, %v142
    %177 = vmatprep.subr.bf16.mxu0 %v146
    %178 = vmatpush1.bf16.msra.mxu0 %v145
    %179 = vmatprep.subr.bf16.mxu0 %v148
    %180 = vmatpush1.bf16.msra.mxu0 %v147
    %181 = vmatprep.subr.bf16.mxu0 %v150
    %182 = vmatpush1.bf16.msra.mxu0 %v149
    %183 = vmatprep.subr.bf16.mxu0 %v152
    %184 = vmatpush1.bf16.msra.mxu0 %v151
    %185 = vmatprep.subr.bf16.mxu0 %v154
    %186 = vmatpush1.bf16.msra.mxu0 %v153
    %187 = vmatprep.subr.bf16.mxu0 %v156
    %188 = vmatpush1.bf16.msra.mxu0 %v155
    %189 = vmatprep.subr.bf16.mxu0 %v158
    %190 = vmatpush1.bf16.msra.mxu0 %v157
    %191 = vmatprep.subr.bf16.mxu0 %v160
    %192 = vmatpush1.bf16.msra.mxu0 %v159
    %193 = vmatprep.subr.bf16.mxu0 0
    %194 = vmatpush1.bf16.msra.mxu0 0
    %195 = vmatprep.subr.bf16.mxu0 0
    %196 = vmatpush1.bf16.msra.mxu0 0
    %197 = vmatprep.subr.bf16.mxu0 0
    %198 = vmatpush1.bf16.msra.mxu0 0
    %199 = vmatprep.subr.bf16.mxu0 0
    %200 = vmatpush1.bf16.msra.mxu0 0
    %201 = vmatprep.subr.bf16.mxu0 0
    %202 = vmatpush1.bf16.msra.mxu0 0
    %203 = vmatprep.subr.bf16.mxu0 0
    %204 = vmatpush1.bf16.msra.mxu0 0
    %205 = vmatprep.subr.bf16.mxu0 0
    %206 = vmatpush1.bf16.msra.mxu0 0
    %207 = vmatprep.subr.bf16.mxu0 0
    %208 = vmatpush1.bf16.msra.mxu0 0
    %209 = vmatprep.mubr.bf16.mxu0 0
    %210 = vmatmul.mubr.bf16.gmra.mrb[0].mxu0 %v68
    %v211 = vpop.f32.mrb[0].mxu0
    %v212 = vadd.f32 %v90, %v211
    %v213 = vpop.f32.mrb[0].mxu0
    %v214 = vadd.f32 %v94, %v213
    %v215 = vpop.f32.mrb[0].mxu0
    %v216 = vpop.f32.mrb[0].mxu0
    %217 = vdwg.mxu0
    %v218 = vmax.f32 %v212, 0.0
    %v219 = vmax.f32 %v214, 0.0
    %v220 = vpack.c.bf16 %v218, %v218
    %v221 = vpack.c.bf16 %v219, %v219
    %v222 = vld [vmem:[#allocation4] sm:$0xff]
    %v223 = vld [vmem:[#allocation4 + $0x8] sm:$0xff]
    %v224 = vld [vmem:[#allocation4 + $0x10] sm:$0xff]
    %v225 = vld [vmem:[#allocation4 + $0x18] sm:$0xff]
    %v226 = vld [vmem:[#allocation4 + $0x20] sm:$0xff]
    %v227 = vld [vmem:[#allocation4 + $0x28] sm:$0xff]
    %v228 = vld [vmem:[#allocation4 + $0x30] sm:$0xff]
    %v229 = vld [vmem:[#allocation4 + $0x38] sm:$0xff]
    %v230 = vld [vmem:[#allocation4 + $0x40] sm:$0xff]
    %v231 = vld [vmem:[#allocation4 + $0x48] sm:$0xff]
    %v232 = vld [vmem:[#allocation4 + $0x50] sm:$0xff]
    %v233 = vld [vmem:[#allocation4 + $0x58] sm:$0xff]
    %v234 = vld [vmem:[#allocation4 + $0x60] sm:$0xff]
    %v235 = vld [vmem:[#allocation4 + $0x68] sm:$0xff]
    %v236 = vld [vmem:[#allocation4 + $0x70] sm:$0xff]
    %v237 = vld [vmem:[#allocation4 + $0x78] sm:$0xff]
    %v238 = vld [vmem:[#allocation4 + $0x80] sm:$0xff]
    %v239 = vld [vmem:[#allocation4 + $0x88] sm:$0xff]
    %v240 = vld [vmem:[#allocation4 + $0x90] sm:$0xff]
    %v241 = vld [vmem:[#allocation4 + $0x98] sm:$0xff]
    %v242 = vld [vmem:[#allocation4 + $0xa0] sm:$0xff]
    %v243 = vld [vmem:[#allocation4 + $0xa8] sm:$0xff]
    %v244 = vld [vmem:[#allocation4 + $0xb0] sm:$0xff]
    %v245 = vld [vmem:[#allocation4 + $0xb8] sm:$0xff]
    %v246 = vld [vmem:[#allocation4 + $0xc0] sm:$0xff]
    %v247 = vld [vmem:[#allocation4 + $0xc8] sm:$0xff]
    %v248 = vld [vmem:[#allocation4 + $0xd0] sm:$0xff]
    %v249 = vld [vmem:[#allocation4 + $0xd8] sm:$0xff]
    %v250 = vld [vmem:[#allocation4 + $0xe0] sm:$0xff]
    %v251 = vld [vmem:[#allocation4 + $0xe8] sm:$0xff]
    %v252 = vld [vmem:[#allocation4 + $0xf0] sm:$0xff]
    %v253 = vld [vmem:[#allocation4 + $0xf8] sm:$0xff]
    %v254 = vld [vmem:[%s4] sm:$0x3]
    %v256 = vlaneseq
    %v257 = vshrl.u32 %v256, 7
    %v258 = vsub.s32 0, %v257
    %v259 = vrot.slane %v254, %v258
    %v260 = vlaneseq
    %v261 = vshrl.u32 %v260, 7
    %v262 = vsub.s32 1, %v261
    %v263 = vrot.slane %v254, %v262
    %v298 = vunpack.c.l.b16 %v222
    %v299 = vunpack.c.h.b16 %v222
    %v300 = vunpack.c.l.b16 %v223
    %v301 = vunpack.c.h.b16 %v223
    %v302 = vunpack.c.l.b16 %v224
    %v303 = vunpack.c.h.b16 %v224
    %v304 = vunpack.c.l.b16 %v225
    %v305 = vunpack.c.h.b16 %v225
    %v306 = vunpack.c.l.b16 %v226
    %v307 = vunpack.c.h.b16 %v226
    %v308 = vunpack.c.l.b16 %v227
    %v309 = vunpack.c.h.b16 %v227
    %v310 = vunpack.c.l.b16 %v228
    %v311 = vunpack.c.h.b16 %v228
    %v312 = vunpack.c.l.b16 %v229
    %v313 = vunpack.c.h.b16 %v229
    %v314 = vunpack.c.l.b16 %v230
    %v315 = vunpack.c.h.b16 %v230
    %v316 = vunpack.c.l.b16 %v231
    %v317 = vunpack.c.h.b16 %v231
    %v318 = vunpack.c.l.b16 %v232
    %v319 = vunpack.c.h.b16 %v232
    %v320 = vunpack.c.l.b16 %v233
    %v321 = vunpack.c.h.b16 %v233
    %v322 = vunpack.c.l.b16 %v234
    %v323 = vunpack.c.h.b16 %v234
    %v324 = vunpack.c.l.b16 %v235
    %v325 = vunpack.c.h.b16 %v235
    %v326 = vunpack.c.l.b16 %v236
    %v327 = vunpack.c.h.b16 %v236
    %v328 = vunpack.c.l.b16 %v237
    %v329 = vunpack.c.h.b16 %v237
    %v330 = vunpack.c.l.b16 %v238
    %v331 = vunpack.c.h.b16 %v238
    %v332 = vunpack.c.l.b16 %v239
    %v333 = vunpack.c.h.b16 %v239
    %v334 = vunpack.c.l.b16 %v240
    %v335 = vunpack.c.h.b16 %v240
    %v336 = vunpack.c.l.b16 %v241
    %v337 = vunpack.c.h.b16 %v241
    %v338 = vunpack.c.l.b16 %v242
    %v339 = vunpack.c.h.b16 %v242
    %v340 = vunpack.c.l.b16 %v243
    %v341 = vunpack.c.h.b16 %v243
    %v342 = vunpack.c.l.b16 %v244
    %v343 = vunpack.c.h.b16 %v244
    %v344 = vunpack.c.l.b16 %v245
    %v345 = vunpack.c.h.b16 %v245
    %v346 = vunpack.c.l.b16 %v246
    %v347 = vunpack.c.h.b16 %v246
    %v348 = vunpack.c.l.b16 %v247
    %v349 = vunpack.c.h.b16 %v247
    %v350 = vunpack.c.l.b16 %v248
    %v351 = vunpack.c.h.b16 %v248
    %v352 = vunpack.c.l.b16 %v249
    %v353 = vunpack.c.h.b16 %v249
    %v354 = vunpack.c.l.b16 %v250
    %v355 = vunpack.c.h.b16 %v250
    %v356 = vunpack.c.l.b16 %v251
    %v357 = vunpack.c.h.b16 %v251
    %v358 = vunpack.c.l.b16 %v252
    %v359 = vunpack.c.h.b16 %v252
    %v360 = vunpack.c.l.b16 %v253
    %v361 = vunpack.c.h.b16 %v253
    %v362 = vpack.c.b16 %v300, %v298
    %v363 = vpack.c.b16 %v301, %v299
    %v364 = vpack.c.b16 %v304, %v302
    %v365 = vpack.c.b16 %v305, %v303
    %v366 = vpack.c.b16 %v308, %v306
    %v367 = vpack.c.b16 %v309, %v307
    %v368 = vpack.c.b16 %v312, %v310
    %v369 = vpack.c.b16 %v313, %v311
    %v370 = vpack.c.b16 %v316, %v314
    %v371 = vpack.c.b16 %v317, %v315
    %v372 = vpack.c.b16 %v320, %v318
    %v373 = vpack.c.b16 %v321, %v319
    %v374 = vpack.c.b16 %v324, %v322
    %v375 = vpack.c.b16 %v325, %v323
    %v376 = vpack.c.b16 %v328, %v326
    %v377 = vpack.c.b16 %v329, %v327
    %v378 = vpack.c.b16 %v332, %v330
    %v379 = vpack.c.b16 %v333, %v331
    %v380 = vpack.c.b16 %v336, %v334
    %v381 = vpack.c.b16 %v337, %v335
    %v382 = vpack.c.b16 %v340, %v338
    %v383 = vpack.c.b16 %v341, %v339
    %v384 = vpack.c.b16 %v344, %v342
    %v385 = vpack.c.b16 %v345, %v343
    %v386 = vpack.c.b16 %v348, %v346
    %v387 = vpack.c.b16 %v349, %v347
    %v388 = vpack.c.b16 %v352, %v350
    %v389 = vpack.c.b16 %v353, %v351
    %v390 = vpack.c.b16 %v356, %v354
    %v391 = vpack.c.b16 %v357, %v355
    %v392 = vpack.c.b16 %v360, %v358
    %v393 = vpack.c.b16 %v361, %v359
    %426 = vmatprep.subr.bf16.mxu0 %v363
    %427 = vmatpush1.bf16.msra.mxu0 %v362
    %428 = vmatprep.subr.bf16.mxu0 %v365
    %429 = vmatpush1.bf16.msra.mxu0 %v364
    %430 = vmatprep.subr.bf16.mxu0 %v367
    %431 = vmatpush1.bf16.msra.mxu0 %v366
    %432 = vmatprep.subr.bf16.mxu0 %v369
    %433 = vmatpush1.bf16.msra.mxu0 %v368
    %434 = vmatprep.subr.bf16.mxu0 %v371
    %435 = vmatpush1.bf16.msra.mxu0 %v370
    %436 = vmatprep.subr.bf16.mxu0 %v373
    %437 = vmatpush1.bf16.msra.mxu0 %v372
    %438 = vmatprep.subr.bf16.mxu0 %v375
    %439 = vmatpush1.bf16.msra.mxu0 %v374
    %440 = vmatprep.subr.bf16.mxu0 %v377
    %441 = vmatpush1.bf16.msra.mxu0 %v376
    %442 = vmatprep.subr.bf16.mxu0 %v379
    %443 = vmatpush1.bf16.msra.mxu0 %v378
    %444 = vmatprep.subr.bf16.mxu0 %v381
    %445 = vmatpush1.bf16.msra.mxu0 %v380
    %446 = vmatprep.subr.bf16.mxu0 %v383
    %447 = vmatpush1.bf16.msra.mxu0 %v382
    %448 = vmatprep.subr.bf16.mxu0 %v385
    %449 = vmatpush1.bf16.msra.mxu0 %v384
    %450 = vmatprep.subr.bf16.mxu0 %v387
    %451 = vmatpush1.bf16.msra.mxu0 %v386
    %452 = vmatprep.subr.bf16.mxu0 %v389
    %453 = vmatpush1.bf16.msra.mxu0 %v388
    %454 = vmatprep.subr.bf16.mxu0 %v391
    %455 = vmatpush1.bf16.msra.mxu0 %v390
    %456 = vmatprep.subr.bf16.mxu0 %v393
    %457 = vmatpush1.bf16.msra.mxu0 %v392
    %458 = vmatprep.mubr.bf16.mxu0 %v221
    %459 = vmatmul.mubr.bf16.gmra.mrb[0].mxu0 %v220
    %v460 = vpop.f32.mrb[0].mxu0
    %v461 = vadd.f32 %v259, %v460
    %v462 = vpop.f32.mrb[0].mxu0
    %v463 = vadd.f32 %v263, %v462
    %v464 = vpop.f32.mrb[0].mxu0
    %v465 = vpop.f32.mrb[0].mxu0
    %466 = vdwg.mxu0
    %v467 = vmax.f32 %v461, 0.0
    %v468 = vmax.f32 %v463, 0.0
    %v469 = vpack.c.bf16 %v467, %v467
    %v470 = vpack.c.bf16 %v468, %v468
    %v471 = vld [vmem:[#allocation6] sm:$0xf]
    %v472 = vld [vmem:[#allocation6 + $0x4] sm:$0xf]
    %v473 = vld [vmem:[#allocation6 + $0x8] sm:$0xf]
    %v474 = vld [vmem:[#allocation6 + $0xc] sm:$0xf]
    %v475 = vld [vmem:[#allocation6 + $0x10] sm:$0xf]
    %v476 = vld [vmem:[#allocation6 + $0x14] sm:$0xf]
    %v477 = vld [vmem:[#allocation6 + $0x18] sm:$0xf]
    %v478 = vld [vmem:[#allocation6 + $0x1c] sm:$0xf]
    %v479 = vld [vmem:[#allocation6 + $0x20] sm:$0xf]
    %v480 = vld [vmem:[#allocation6 + $0x24] sm:$0xf]
    %v481 = vld [vmem:[#allocation6 + $0x28] sm:$0xf]
    %v482 = vld [vmem:[#allocation6 + $0x2c] sm:$0xf]
    %v483 = vld [vmem:[#allocation6 + $0x30] sm:$0xf]
    %v484 = vld [vmem:[#allocation6 + $0x34] sm:$0xf]
    %v485 = vld [vmem:[#allocation6 + $0x38] sm:$0xf]
    %v486 = vld [vmem:[#allocation6 + $0x3c] sm:$0xf]
    %v487 = vld [vmem:[#allocation6 + $0x40] sm:$0xf]
    %v488 = vld [vmem:[#allocation6 + $0x44] sm:$0xf]
    %v489 = vld [vmem:[#allocation6 + $0x48] sm:$0xf]
    %v490 = vld [vmem:[#allocation6 + $0x4c] sm:$0xf]
    %v491 = vld [vmem:[#allocation6 + $0x50] sm:$0xf]
    %v492 = vld [vmem:[#allocation6 + $0x54] sm:$0xf]
    %v493 = vld [vmem:[#allocation6 + $0x58] sm:$0xf]
    %v494 = vld [vmem:[#allocation6 + $0x5c] sm:$0xf]
    %v495 = vld [vmem:[#allocation6 + $0x60] sm:$0xf]
    %v496 = vld [vmem:[#allocation6 + $0x64] sm:$0xf]
    %v497 = vld [vmem:[#allocation6 + $0x68] sm:$0xf]
    %v498 = vld [vmem:[#allocation6 + $0x6c] sm:$0xf]
    %v499 = vld [vmem:[#allocation6 + $0x70] sm:$0xf]
    %v500 = vld [vmem:[#allocation6 + $0x74] sm:$0xf]
    %v501 = vld [vmem:[#allocation6 + $0x78] sm:$0xf]
    %v502 = vld [vmem:[#allocation6 + $0x7c] sm:$0xf]
    %v503 = vld [vmem:[%s6] sm:$0x1]
    %v505 = vlaneseq
    %v506 = vshrl.u32 %v505, 7
    %v507 = vsub.s32 0, %v506
    %v508 = vrot.slane %v503, %v507
    %v542 = vunpack.c.l.b16 %v471
    %v543 = vunpack.c.l.b16 %v472
    %v544 = vunpack.c.l.b16 %v473
    %v545 = vunpack.c.l.b16 %v474
    %v546 = vunpack.c.l.b16 %v475
    %v547 = vunpack.c.l.b16 %v476
    %v548 = vunpack.c.l.b16 %v477
    %v549 = vunpack.c.l.b16 %v478
    %v550 = vunpack.c.l.b16 %v479
    %v551 = vunpack.c.l.b16 %v480
    %v552 = vunpack.c.l.b16 %v481
    %v553 = vunpack.c.l.b16 %v482
    %v554 = vunpack.c.l.b16 %v483
    %v555 = vunpack.c.l.b16 %v484
    %v556 = vunpack.c.l.b16 %v485
    %v557 = vunpack.c.l.b16 %v486
    %v558 = vunpack.c.l.b16 %v487
    %v559 = vunpack.c.l.b16 %v488
    %v560 = vunpack.c.l.b16 %v489
    %v561 = vunpack.c.l.b16 %v490
    %v562 = vunpack.c.l.b16 %v491
    %v563 = vunpack.c.l.b16 %v492
    %v564 = vunpack.c.l.b16 %v493
    %v565 = vunpack.c.l.b16 %v494
    %v566 = vunpack.c.l.b16 %v495
    %v567 = vunpack.c.l.b16 %v496
    %v568 = vunpack.c.l.b16 %v497
    %v569 = vunpack.c.l.b16 %v498
    %v570 = vunpack.c.l.b16 %v499
    %v571 = vunpack.c.l.b16 %v500
    %v572 = vunpack.c.l.b16 %v501
    %v573 = vunpack.c.l.b16 %v502
    %v574 = vpack.c.b16 %v543, %v542
    %v575 = vpack.c.b16 %v545, %v544
    %v576 = vpack.c.b16 %v547, %v546
    %v577 = vpack.c.b16 %v549, %v548
    %v578 = vpack.c.b16 %v551, %v550
    %v579 = vpack.c.b16 %v553, %v552
    %v580 = vpack.c.b16 %v555, %v554
    %v581 = vpack.c.b16 %v557, %v556
    %v582 = vpack.c.b16 %v559, %v558
    %v583 = vpack.c.b16 %v561, %v560
    %v584 = vpack.c.b16 %v563, %v562
    %v585 = vpack.c.b16 %v565, %v564
    %v586 = vpack.c.b16 %v567, %v566
    %v587 = vpack.c.b16 %v569, %v568
    %v588 = vpack.c.b16 %v571, %v570
    %v589 = vpack.c.b16 %v573, %v572
    %606 = vmatprep.subr.bf16.mxu0 0
    %607 = vmatpush1.bf16.msra.mxu0 %v574
    %608 = vmatprep.subr.bf16.mxu0 0
    %609 = vmatpush1.bf16.msra.mxu0 %v575
    %610 = vmatprep.subr.bf16.mxu0 0
    %611 = vmatpush1.bf16.msra.mxu0 %v576
    %612 = vmatprep.subr.bf16.mxu0 0
    %613 = vmatpush1.bf16.msra.mxu0 %v577
    %614 = vmatprep.subr.bf16.mxu0 0
    %615 = vmatpush1.bf16.msra.mxu0 %v578
    %616 = vmatprep.subr.bf16.mxu0 0
    %617 = vmatpush1.bf16.msra.mxu0 %v579
    %618 = vmatprep.subr.bf16.mxu0 0
    %619 = vmatpush1.bf16.msra.mxu0 %v580
    %620 = vmatprep.subr.bf16.mxu0 0
    %621 = vmatpush1.bf16.msra.mxu0 %v581
    %622 = vmatprep.subr.bf16.mxu0 0
    %623 = vmatpush1.bf16.msra.mxu0 %v582
    %624 = vmatprep.subr.bf16.mxu0 0
    %625 = vmatpush1.bf16.msra.mxu0 %v583
    %626 = vmatprep.subr.bf16.mxu0 0
    %627 = vmatpush1.bf16.msra.mxu0 %v584
    %628 = vmatprep.subr.bf16.mxu0 0
    %629 = vmatpush1.bf16.msra.mxu0 %v585
    %630 = vmatprep.subr.bf16.mxu0 0
    %631 = vmatpush1.bf16.msra.mxu0 %v586
    %632 = vmatprep.subr.bf16.mxu0 0
    %633 = vmatpush1.bf16.msra.mxu0 %v587
    %634 = vmatprep.subr.bf16.mxu0 0
    %635 = vmatpush1.bf16.msra.mxu0 %v588
    %636 = vmatprep.subr.bf16.mxu0 0
    %637 = vmatpush1.bf16.msra.mxu0 %v589
    %638 = vmatprep.mubr.bf16.mxu0 %v470
    %639 = vmatmul.mubr.bf16.gmra.mrb[0].mxu0 %v469
    %v640 = vpop.f32.mrb[0].mxu0
    %v641 = vadd.f32 %v508, %v640
    %v642 = vpop.f32.mrb[0].mxu0
    %v643 = vpop.f32.mrb[0].mxu0
    %v644 = vpop.f32.mrb[0].mxu0
    %645 = vdwg.mxu0
    %v646 = vmax.f32 %v641, 0.0
    %647 = vst [vmem:[%s7] sm:$0xff] %v646
    // Predicated region
    $region42: #{value_network_forward.1} parent=1 // pred_check
      _
    $region43: #{value_network_forward.1} parent=1 // pred_check_branch
      %649 = sbr.rel (0) target = $region45
    $region44: #{value_network_forward.1} parent=1 // pred_region
      _
    $region45: #{value_network_forward.1} parent=1 // pred_fallthru
      _
    // Predicated region
    $region46: #{value_network_forward.1} parent=1 // pred_check
      _
    $region47: #{value_network_forward.1} parent=1 // pred_check_branch
      %651 = sbr.rel (0) target = $region49
    $region48: #{value_network_forward.1} parent=1 // pred_region
      _
    $region49: #{value_network_forward.1} parent=1 // pred_fallthru
      _
    %652 = vsyncpa [#allocation3], 1
    %653 = vsyncpa [#allocation5], 1

</llo_original>
